<compile_context>
chip_gen: v6e
topology: v6e:2x2x1
jax: 0.10.0
libtpu: 0.0.40
codegen_flags: <defaults>
</compile_context>

<pallas_src>
import jax
import jax.numpy as jnp
from jax import lax
from jax.experimental import pallas as pl
from jax.experimental.pallas import tpu as pltpu


_RC = 256  # rows per in-kernel reduction chunk (bounds vreg live ranges)


def _round_up(x, m):
    return ((x + m - 1) // m) * m


# --------------------------------------------------------------------------
# Path 1: canonical DCGAN head (H == W == kernel, conv output is 1x1).
# The patch matrix is a zero-copy reshape of x; the kernel is a row-wise
# matvec + sigmoid, tiled over M = N rows.
# --------------------------------------------------------------------------
def _matvec_sigmoid_kernel(p_ref, w_ref, o_ref):
    # p_ref: (TM, K) activations (input dtype); w_ref: (1, K) f32; o_ref: (TM, 1).
    tm = p_ref.shape[0]
    w = w_ref[...]  # resident in VMEM across the grid

    def rowsum_sigmoid(p):
        # VPU multiply + XLU cross-lane reduce (no MXU: 1 output channel);
        # EUP exp + approx reciprocal ride otherwise-idle slots.
        s = jnp.sum(p.astype(jnp.float32) * w, axis=-1, keepdims=True)
        return pl.reciprocal(1.0 + jnp.exp(-s), approx=True)

    if tm > _RC and tm % _RC == 0:
        # Row-chunked so a (1024, K) f32 product never has to live in vregs;
        # compute is fully hidden under the input DMA either way.
        def body(c, carry):
            r0 = pl.multiple_of(c * _RC, _RC)
            o_ref[pl.ds(r0, _RC), :] = rowsum_sigmoid(
                p_ref[pl.ds(r0, _RC), :]).astype(o_ref.dtype)
            return carry

        lax.fori_loop(0, tm // _RC, body, 0, unroll=True)
    else:
        o_ref[...] = rowsum_sigmoid(p_ref[...]).astype(o_ref.dtype)


def _plan_tm(m, k, itemsize):
    """Rows per block.  <=8 MiB per input block (double-buffered by the
    pipeline -> <=16 MiB), cap 1024 rows, and >=2 grid steps when there is
    enough work so both v7x TensorCores participate (v5e/v6e: negligible)."""
    budget = 8 * 1024 * 1024
    cap = max(8, (budget // max(1, k * itemsize)) // 8 * 8)
    tm = min(1024, cap)
    if m < 64:
        # Tiny problem: a single block equal to the full array (no (8,128)
        # block constraints, no padding, no masked tail).
        return m
    half = -(-m // 2)
    quantum = _RC if half >= _RC else 8      # chunkable when large
    return max(8, min(tm, _round_up(half, quantum)))


def _matvec_sigmoid(patches, wrow, out_dtype):
    m, k = patches.shape
    tm = _plan_tm(m, k, patches.dtype.itemsize)
    grid = (pl.cdiv(m, tm),)
    return pl.pallas_call(
        _matvec_sigmoid_kernel,
        out_shape=jax.ShapeDtypeStruct((m, 1), out_dtype),
        grid=grid,
        in_specs=[
            pl.BlockSpec((tm, k), lambda i: (i, 0)),   # streamed patch rows
            pl.BlockSpec((1, k), lambda i: (0, 0)),    # weight row, resident
        ],
        out_specs=pl.BlockSpec((tm, 1), lambda i: (i, 0)),
        compiler_params=pltpu.CompilerParams(
            dimension_semantics=("parallel",),
            vmem_limit_bytes=32 * 1024 * 1024,
        ),
        cost_estimate=pl.CostEstimate(
            flops=2 * m * k,
            transcendentals=m,
            bytes_accessed=m * k * patches.dtype.itemsize + 4 * k
            + m * jnp.dtype(out_dtype).itemsize,
        ),
    )(patches, wrow)


# --------------------------------------------------------------------------
# Path 2: general spatial size.  Stream x directly (no HBM im2col) and do the
# kh*kw shifted multiply-accumulates inside the kernel, gridded over batch.
# --------------------------------------------------------------------------
def _conv_sigmoid(x, wf):
    n, c, h, wd = x.shape
    _, _, kh, kw = wf.shape
    ho, wo = h - kh + 1, wd - kw + 1

    per_sample = c * h * wd * x.dtype.itemsize
    bt = max(1, (4 * 1024 * 1024) // per_sample)   # ~<=4 MiB x-block (double-buffered)
    if n >= 2:
        bt = min(bt, -(-n // 2))                   # >=2 grid steps (v7x: both TCs)
    bt = min(bt, n)
    grid = (pl.cdiv(n, bt),)

    def kernel(x_ref, w_ref, o_ref):
        # x_ref: (BT, C, H, W); w_ref: (1, C, KH, KW) f32; o_ref: (BT, HO, WO)
        acc = jnp.zeros(o_ref.shape, jnp.float32)
        for dh in range(kh):                        # 16 shifted MACs, VMEM-local only
            for dw in range(kw):
                xs = x_ref[:, :, dh:dh + ho, dw:dw + wo].astype(jnp.float32)
                ws = w_ref[:, :, dh:dh + 1, dw:dw + 1]        # (1, C, 1, 1)
                acc = acc + jnp.sum(xs * ws, axis=1)
        o_ref[...] = pl.reciprocal(1.0 + jnp.exp(-acc), approx=True).astype(o_ref.dtype)

    out = pl.pallas_call(
        kernel,
        out_shape=jax.ShapeDtypeStruct((n, ho, wo), x.dtype),
        grid=grid,
        in_specs=[
            pl.BlockSpec((bt, c, h, wd), lambda i: (i, 0, 0, 0)),   # streamed x slabs
            pl.BlockSpec((1, c, kh, kw), lambda i: (0, 0, 0, 0)),   # weights, resident
        ],
        out_specs=pl.BlockSpec((bt, ho, wo), lambda i: (i, 0, 0)),
        compiler_params=pltpu.CompilerParams(
            dimension_semantics=("parallel",),
            vmem_limit_bytes=32 * 1024 * 1024,
        ),
        cost_estimate=pl.CostEstimate(
            flops=2 * n * ho * wo * c * kh * kw,
            transcendentals=n * ho * wo,
            bytes_accessed=n * c * h * wd * x.dtype.itemsize
            + wf.size * 4 + n * ho * wo * x.dtype.itemsize,
        ),
    )(x, wf)
    # TODO(synk): for very large H,W additionally tile over output rows with a
    # (kh-1)-row halo'd block instead of whole (C,H,W) slabs per grid step.
    return out.reshape(n * ho * wo, 1)


# --------------------------------------------------------------------------
# Public forward (matches the PyTorch module semantics).
# --------------------------------------------------------------------------
def discriminator_forward(x, conv_weight):
    """x: (N, C, H, W); conv_weight: (1, C, 4, 4), bias=False.
    Returns (N*(H-3)*(W-3), 1): conv(stride=1, valid) -> sigmoid -> view(-1, 1)."""
    n, c, h, wd = x.shape
    kh, kw = conv_weight.shape[-2], conv_weight.shape[-1]
    ho, wo = h - kh + 1, wd - kw + 1

    if ho == 1 and wo == 1:
        # Canonical DCGAN head: the single 4x4 window covers the whole map, so
        # the patch matrix is a contiguous (zero-copy) reshape of x.
        k = c * kh * kw
        patches = x.reshape(n, k)
        wrow = conv_weight.reshape(1, k).astype(jnp.float32)
        return _matvec_sigmoid(patches, wrow, x.dtype)

    # General spatial size: stream x, no im2col materialization in HBM.
    return _conv_sigmoid(x, conv_weight.astype(jnp.float32))


def _reference(x, conv_weight):
    y = lax.conv_general_dilated(
        x.astype(jnp.float32), conv_weight.astype(jnp.float32),
        window_strides=(1, 1), padding="VALID",
        dimension_numbers=("NCHW", "OIHW", "NCHW"))
    return jax.nn.sigmoid(y).reshape(-1, 1)


if __name__ == "__main__":
    feature_size = 4
    c_in = feature_size * 8      # 32

    key = jax.random.PRNGKey(0)
    kx, kw_, kx2, kx3 = jax.random.split(key, 4)
    conv_weight = jax.random.normal(kw_, (1, c_in, 4, 4), dtype=jnp.float32) * 0.05

    # 1) Canonical DCGAN head: 4x4 spatial -> 1x1 conv output (single-block path).
    x = jax.random.normal(kx, (2, c_in, 4, 4), dtype=jnp.float32)
    out = jax.block_until_ready(discriminator_forward(x, conv_weight))
    ref = _reference(x, conv_weight)
    assert out.shape == (2, 1), out.shape
    assert bool(jnp.all(jnp.isfinite(out)))
    assert bool(jnp.all((out >= 0.0) & (out <= 1.0)))
    assert bool(jnp.allclose(out, ref, rtol=0.0, atol=1e-2))

    # 2) Larger batch exercises the tiled path: 2 grid steps, in-kernel row
    #    chunking, and a ragged tail block (no jnp.pad copy).
    xb = jax.random.normal(kx3, (520, c_in, 4, 4), dtype=jnp.float32)
    outb = jax.block_until_ready(discriminator_forward(xb, conv_weight))
    refb = _reference(xb, conv_weight)
    assert outb.shape == (520, 1), outb.shape
    assert bool(jnp.allclose(outb, refb, rtol=0.0, atol=1e-2))

    # 3) General spatial case (6x6 -> 3x3) exercises the streaming conv path.
    x2 = jax.random.normal(kx2, (2, c_in, 6, 6), dtype=jnp.float32)
    out2 = jax.block_until_ready(discriminator_forward(x2, conv_weight))
    ref2 = _reference(x2, conv_weight)
    assert out2.shape == (2 * 3 * 3, 1), out2.shape
    assert bool(jnp.allclose(out2, ref2, rtol=0.0, atol=1e-2))

    print("KERNEL_OK")
</pallas_src>

<mosaic_0001>
module attributes {stable_mosaic.version = 11 : i64} {
  func.func @_matvec_sigmoid_kernel(%arg0: i32, %arg1: memref<2x512xf32, #tpu.memory_space<vmem>>, %arg2: memref<1x512xf32, #tpu.memory_space<vmem>>, %arg3: memref<2x1xf32, #tpu.memory_space<vmem>>) attributes {dimension_semantics = [#tpu.dimension_semantics<parallel>], iteration_bounds = array<i64: 1>, scalar_prefetch = 0 : i64, scratch_operands = 0 : i64, tpu.core_type = #tpu.core_type<tc>, window_params = [{transform_indices = @transform_0, window_bounds = array<i64: 2, 512>}, {pipeline_mode = #tpu.pipeline_mode<synchronous>, transform_indices = @transform_1, window_bounds = array<i64: 1, 512>}, {transform_indices = @transform_2, window_bounds = array<i64: 2, 1>}]} {
    %c0 = arith.constant 0 : index
    %c0_0 = arith.constant 0 : index
    %0 = vector.load %arg2[%c0, %c0_0] : memref<1x512xf32, #tpu.memory_space<vmem>>, vector<1x512xf32>
    %c0_1 = arith.constant 0 : index
    %c0_2 = arith.constant 0 : index
    %1 = vector.load %arg1[%c0_1, %c0_2] : memref<2x512xf32, #tpu.memory_space<vmem>>, vector<2x512xf32>
    %2 = vector.broadcast %0 : vector<1x512xf32> to vector<2x512xf32>
    %3 = arith.mulf %1, %2 : vector<2x512xf32>
    %cst = arith.constant dense<0.000000e+00> : vector<2xf32>
    %4 = vector.multi_reduction <add>, %3, %cst [1] : vector<2x512xf32> to vector<2xf32>
    %5 = vector.shape_cast %4 : vector<2xf32> to vector<2x1xf32>
    %cst_3 = arith.constant 0.000000e+00 : f32
    %6 = vector.broadcast %cst_3 : f32 to vector<2x1xf32>
    %7 = arith.subf %6, %5 : vector<2x1xf32>
    %8 = math.exp %7 : vector<2x1xf32>
    %cst_4 = arith.constant 1.000000e+00 : f32
    %9 = vector.broadcast %cst_4 : f32 to vector<2x1xf32>
    %10 = arith.addf %9, %8 : vector<2x1xf32>
    %11 = tpu.reciprocal %10 {approx = true} : vector<2x1xf32> -> vector<2x1xf32>
    %c0_5 = arith.constant 0 : index
    %c0_6 = arith.constant 0 : index
    %12 = vector.load %arg3[%c0_5, %c0_6] : memref<2x1xf32, #tpu.memory_space<vmem>>, vector<2x1xf32>
    tpu.vector_store %arg3[%c0_5, %c0_6], %11 {strides = array<i32>} : memref<2x1xf32, #tpu.memory_space<vmem>>, vector<2x1xf32>,
    return
  }
  func.func @transform_0(%arg0: i32) -> (i32, i32) {
    %c0_i32 = arith.constant 0 : i32
    %c0_i32_0 = arith.constant 0 : i32
    return %arg0, %c0_i32 : i32, i32
  }
  func.func @transform_1(%arg0: i32) -> (i32, i32) {
    %c0_i32 = arith.constant 0 : i32
    %c0_i32_0 = arith.constant 0 : i32
    %c0_i32_1 = arith.constant 0 : i32
    return %c0_i32, %c0_i32_0 : i32, i32
  }
  func.func @transform_2(%arg0: i32) -> (i32, i32) {
    %c0_i32 = arith.constant 0 : i32
    %c0_i32_0 = arith.constant 0 : i32
    return %arg0, %c0_i32 : i32, i32
  }
}

</mosaic_0001>

<llo_original>
// kernel: tpu_custom_call.1
$region0: #{tpu_custom_call.1}
  #allocation0 [shape = 'u32[]', space=smem, size = 0x4, offset = 0x4, fixed_abs, tag = 'smem constant byte address 0x4 - core index']
  #allocation1 [shape = 'u32[144,128]{1,0:T(1,128)}', space=vmem, size = 0x12000, scoped, tag = 'internal scratch']
  %s0 = inlined_call_operand.hbm [shape: f32[2,512], index: 0, kind: input, shape index: {}]
  %s1 = inlined_call_operand.hbm [shape: f32[1,512], index: 1, kind: input, shape index: {}]
  %s2 = inlined_call_operand.vmem [shape: f32[2,1], index: 2, kind: output, shape index: {}]
  %s3 = sld [smem:[#allocation0]]
  $region26: #{tpu_custom_call.1} parent=0
    _
  %s5 = ssub.s32 1, %s3
  %s6 = scalar_select 0, %s5, %s3
  $region1: #{tpu_custom_call.1} parent=0
    #allocation2 [shape = 'u8[4096]{0}', space=vmem, size = 0x1000, scoped, tag = 'input window, operand 0, single buffered']
    #allocation3 [shape = 's32[1]{0}', space=sflag, size = 0x4, scoped, tag = 'scoped memory for tpu_custom_call.1']
    #allocation4 [shape = 'u8[2048]{0}', space=vmem, size = 0x800, scoped, tag = 'input window, operand 1, single buffered']
    #allocation5 [shape = 's32[1]{0}', space=sflag, size = 0x4, scoped, tag = 'scoped memory for tpu_custom_call.1']
    %7 = vsyncpa [#allocation3], 0
    %8 = vsyncpa [#allocation5], 0
    // Predicated region
    $region2: #{tpu_custom_call.1} parent=1 // pred_check
      _
    $region3: #{tpu_custom_call.1} parent=1 // pred_check_branch
      %10 = sbr.rel (0) target = $region5
    $region4: #{tpu_custom_call.1} parent=1 // pred_region
      %s12 = ssub.s32 128, 128
      %13 = vsyncadd [#allocation3], %s12
      %s15 = sshll.u32 [#allocation2], 4
      %s16 = int_to_ptr.vmem [resolvable:$true] %s15
      %18 = dma.hbm_to_vmem [thread:$0]  %s0, 128, %s16, [#allocation3]
    $region5: #{tpu_custom_call.1} parent=1 // pred_fallthru
      _
    // Predicated region
    $region6: #{tpu_custom_call.1} parent=1 // pred_check
      _
    $region7: #{tpu_custom_call.1} parent=1 // pred_check_branch
      %20 = sbr.rel (0) target = $region9
    $region8: #{tpu_custom_call.1} parent=1 // pred_region
      %s22 = ssub.s32 64, 64
      %23 = vsyncadd [#allocation5], %s22
      %s25 = sshll.u32 [#allocation4], 4
      %s26 = int_to_ptr.vmem [resolvable:$true] %s25
      %28 = dma.hbm_to_vmem [thread:$0]  %s1, 64, %s26, [#allocation5]
    $region9: #{tpu_custom_call.1} parent=1 // pred_fallthru
      _
    // Predicated region
    $region10: #{tpu_custom_call.1} parent=1 // pred_check
      _
    $region11: #{tpu_custom_call.1} parent=1 // pred_check_branch
      %30 = sbr.rel (0) target = $region13
    $region12: #{tpu_custom_call.1} parent=1 // pred_region
      %31 = dma.done [#allocation3], 128
    $region13: #{tpu_custom_call.1} parent=1 // pred_fallthru
      _
    // Predicated region
    $region14: #{tpu_custom_call.1} parent=1 // pred_check
      _
    $region15: #{tpu_custom_call.1} parent=1 // pred_check_branch
      %33 = sbr.rel (0) target = $region17
    $region16: #{tpu_custom_call.1} parent=1 // pred_region
      %34 = dma.done [#allocation5], 64
    $region17: #{tpu_custom_call.1} parent=1 // pred_fallthru
      _
    %v35 = vld [vmem:[#allocation4] sm:$0xf]
    %v36 = vld [vmem:[#allocation2] sm:$0xff]
    %v38 = vlaneseq
    %v39 = vshrl.u32 %v38, 7
    %v40 = vsub.s32 0, %v39
    %v41 = vrot.slane %v35, %v40
    %v42 = vlaneseq
    %v43 = vshrl.u32 %v42, 7
    %v44 = vsub.s32 1, %v43
    %v45 = vrot.slane %v35, %v44
    %v46 = vlaneseq
    %v47 = vshrl.u32 %v46, 7
    %v48 = vsub.s32 2, %v47
    %v49 = vrot.slane %v35, %v48
    %v50 = vlaneseq
    %v51 = vshrl.u32 %v50, 7
    %v52 = vsub.s32 3, %v51
    %v53 = vrot.slane %v35, %v52
    %v54 = vcombine.low %v41, %v45
    %v55 = vcombine.low %v49, %v53
    %v57 = vunpack.c.l.s4 1983009808
    %v58 = vunpack.c.0.s8 %v57
    %v59 = vlaneseq
    %v60 = vshrl.u32 %v59, 7
    %v61 = vsub.s32 %v58, %v60
    %v62 = vrot.slane %v54, %v61
    %v64 = vunpack.c.l.s4 1983009808
    %v65 = vunpack.c.0.s8 %v64
    %v66 = vlaneseq
    %v67 = vshrl.u32 %v66, 7
    %v68 = vsub.s32 %v65, %v67
    %v69 = vrot.slane %v55, %v68
    %v70 = vcombine.low %v62, %v69
    %v72 = vmul.f32 %v36, %v70
    %v74 = vcombine.high %v72, %v72
    %v76 = vunpack.c.l.s4 1983009808
    %v77 = vunpack.c.0.s8 %v76
    %v78 = vlaneseq
    %v79 = vshrl.u32 %v78, 7
    %v80 = vsub.s32 %v77, %v79
    %v81 = vrot.slane %v72, %v80
    %v83 = vunpack.c.l.s4 1983009808
    %v84 = vunpack.c.0.s8 %v83
    %v85 = vlaneseq
    %v86 = vshrl.u32 %v85, 7
    %v87 = vsub.s32 %v84, %v86
    %v88 = vrot.slane %v74, %v87
    %v89 = vcombine.high %v81, %v81
    %v90 = vcombine.high %v88, %v88
    %vm95 = vcmask 1041408
    %v96 = vsel %vm95, %v81, 0.0
    %v97 = vsel %vm95, %v89, 0.0
    %v98 = vadd.f32 %v96, %v97
    %v99 = vsel %vm95, %v88, 0.0
    %v100 = vadd.f32 %v98, %v99
    %v101 = vsel %vm95, %v90, 0.0
    %v102 = vadd.f32 %v100, %v101
    %103 = vadd.xlane.f32.xlu0 %v102
    %v104 = vpop.xlane.xlu0 %103
    %v105 = vsub.f32 0.0, %v104
    %v106 = vmul.f32 %v105, 1.442695
    %v107 = vpow.pop %v106
    %v108 = vadd.f32 %v107, 1.0
    %v109 = vrcp.pop %v108
    %vm110 = vcmask 1024
    %111 = vst.msk [vmem:[%s2] sm:$0x3] %vm110, %v109
    // Predicated region
    $region18: #{tpu_custom_call.1} parent=1 // pred_check
      _
    $region19: #{tpu_custom_call.1} parent=1 // pred_check_branch
      %113 = sbr.rel (0) target = $region21
    $region20: #{tpu_custom_call.1} parent=1 // pred_region
      _
    $region21: #{tpu_custom_call.1} parent=1 // pred_fallthru
      _
    // Predicated region
    $region22: #{tpu_custom_call.1} parent=1 // pred_check
      _
    $region23: #{tpu_custom_call.1} parent=1 // pred_check_branch
      %115 = sbr.rel (0) target = $region25
    $region24: #{tpu_custom_call.1} parent=1 // pred_region
      _
    $region25: #{tpu_custom_call.1} parent=1 // pred_fallthru
      _
    %116 = vsyncpa [#allocation3], 1
    %117 = vsyncpa [#allocation5], 1

</llo_original>
